<compile_context>
chip_gen: v6e
topology: v6e:2x2x1
jax: 0.10.0
libtpu: 0.0.40
codegen_flags: <defaults>
</compile_context>

<pallas_src>
import functools

import jax
import jax.numpy as jnp
from jax import lax
from jax.experimental import pallas as pl
from jax.experimental.pallas import tpu as pltpu

D_MODEL = 512      # module default; multiple of 128 -> lane-dense stores
MAX_LEN = 64       # small stand-in for max_len=5000 (buffer length, only :S used)
DROPOUT_P = 0.1


# --------------------------- PE buffer (init-time) ---------------------------
def make_positional_encoding(max_len, d_model):
    """Same math as the PyTorch __init__ (sin on even cols, cos on odd cols)."""
    position = jnp.arange(max_len, dtype=jnp.float32)[:, None]            # [L, 1]
    div_term = jnp.exp(
        jnp.arange(0, d_model, 2, dtype=jnp.float32)
        * (-jnp.log(jnp.float32(10000.0)) / d_model)
    )                                                                     # [D/2]
    angles = position * div_term[None, :]                                 # [L, D/2]
    pe = jnp.zeros((max_len, d_model), jnp.float32)
    pe = pe.at[:, 0::2].set(jnp.sin(angles))
    pe = pe.at[:, 1::2].set(jnp.cos(angles))
    return pe


# ------------------------- Portable in-kernel hash RNG -----------------------
def _lsr(x, k):
    # Logical shift right for int32 (arithmetic shift + mask of sign-extension).
    return jnp.bitwise_and(jnp.right_shift(x, k), jnp.int32((1 << (32 - k)) - 1))


def _mix32(x):
    # Murmur-style integer finalizer (constants fit in int31; int32 mul wraps,
    # which is well-defined XLA semantics).  All VPU ops, portable everywhere.
    x = jnp.bitwise_xor(x, _lsr(x, 16))
    x = x * jnp.int32(0x45D9F3B)
    x = jnp.bitwise_xor(x, _lsr(x, 16))
    x = x * jnp.int32(0x45D9F3B)
    x = jnp.bitwise_xor(x, _lsr(x, 16))
    return x


# -------------------------------- Kernels ------------------------------------
def _pe_add_kernel(x_ref, pe_ref, o_ref):
    # Eval mode: dropout is identity.  One fused add, lane-dense store.
    o_ref[...] = x_ref[...] + pe_ref[...]


def _pe_add_dropout_kernel(seed_ref, x_ref, pe_ref, o_ref, *, p):
    # Training mode: fused (x + pe) and inverted-scaling dropout in one pass.
    y = x_ref[...] + pe_ref[...]                          # (S, D) f32
    S, D = y.shape

    # Unique int32 counter per element across the whole (B, S, D) tensor.
    rows = lax.broadcasted_iota(jnp.int32, (S, D), 0)
    cols = lax.broadcasted_iota(jnp.int32, (S, D), 1)
    b = pl.program_id(0)
    idx = (b * S + rows) * D + cols
    # Fold in the seed, then hash.
    h = _mix32(jnp.bitwise_xor(idx, seed_ref[0] * jnp.int32(0x27D4EB2D)))

    # Uniform in [0, 1) from the low 23 bits.
    u = jnp.bitwise_and(h, jnp.int32(0x7FFFFF)).astype(jnp.float32) * (1.0 / float(1 << 23))
    keep = (u >= p).astype(jnp.float32)                   # drop with prob p
    o_ref[...] = y * keep * (1.0 / (1.0 - p))             # inverted dropout scaling


# ------------------------------- Wrapper -------------------------------------
def positional_encoding_forward(x, pe, *, dropout_p=DROPOUT_P, training=False, seed=0):
    """x: [B, S, D] float32, pe: [max_len, D] float32 (precomputed buffer)."""
    B, S, D = x.shape
    pe_s = pe[:S, :]                                       # static slice (buffer lookup)

    x_spec = pl.BlockSpec((pl.Squeezed(), S, D), lambda b: (b, 0, 0))
    pe_spec = pl.BlockSpec((S, D), lambda b: (0, 0))
    out_spec = pl.BlockSpec((pl.Squeezed(), S, D), lambda b: (b, 0, 0))
    out_shape = jax.ShapeDtypeStruct((B, S, D), jnp.float32)
    cparams = pltpu.CompilerParams(dimension_semantics=("parallel",))

    if (not training) or dropout_p == 0.0:
        return pl.pallas_call(
            _pe_add_kernel,
            out_shape=out_shape,
            grid=(B,),
            in_specs=[x_spec, pe_spec],
            out_specs=out_spec,
            compiler_params=cparams,
        )(x, pe_s)

    seed_arr = jnp.array([seed], jnp.int32)
    return pl.pallas_call(
        functools.partial(_pe_add_dropout_kernel, p=float(dropout_p)),
        out_shape=out_shape,
        grid=(B,),
        in_specs=[
            pl.BlockSpec(memory_space=pltpu.MemorySpace.SMEM),   # scalar seed
            x_spec,
            pe_spec,
        ],
        out_specs=out_spec,
        compiler_params=cparams,
    )(seed_arr, x, pe_s)


def positional_encoding_reference(x, pe):
    """Plain-JAX reference for eval mode (dropout = identity)."""
    S = x.shape[1]
    return x + pe[None, :S, :]


# --------------------------------- Main --------------------------------------
if __name__ == "__main__":
    key = jax.random.PRNGKey(0)
    B, S = 2, 8

    pe = make_positional_encoding(MAX_LEN, D_MODEL)
    x = jax.random.normal(key, (B, S, D_MODEL), jnp.float32)

    # Eval mode: exact check vs reference.
    out = positional_encoding_forward(x, pe, training=False)
    out = jax.block_until_ready(out)
    ref = positional_encoding_reference(x, pe)
    assert out.shape == (B, S, D_MODEL)
    assert jnp.allclose(out, ref, atol=1e-5, rtol=1e-5), "eval-mode mismatch vs reference"

    # Training mode: mask is pseudo-random; verify the dropout invariant
    # (every element is either 0 or (x+pe)/(1-p)), and that the drop rate is sane.
    out_tr = positional_encoding_forward(x, pe, training=True, seed=1234)
    out_tr = jax.block_until_ready(out_tr)
    scaled = ref / (1.0 - DROPOUT_P)
    ok_vals = jnp.all((jnp.abs(out_tr) <= 1e-6) | (jnp.abs(out_tr - scaled) <= 1e-4))
    drop_rate = jnp.mean((jnp.abs(out_tr) <= 1e-6).astype(jnp.float32))
    assert out_tr.shape == (B, S, D_MODEL)
    assert bool(ok_vals), "training-mode dropout values are not in {0, y/(1-p)}"
    assert 0.02 <= float(drop_rate) <= 0.25, f"drop rate {float(drop_rate):.3f} far from p={DROPOUT_P}"

    print("KERNEL_OK")
</pallas_src>

<mosaic_0001>
module attributes {stable_mosaic.version = 11 : i64} {
  func.func @_pe_add_kernel(%arg0: i32, %arg1: memref<1x8x512xf32, #tpu.memory_space<vmem>>, %arg2: memref<8x512xf32, #tpu.memory_space<vmem>>, %arg3: memref<1x8x512xf32, #tpu.memory_space<vmem>>) attributes {dimension_semantics = [#tpu.dimension_semantics<parallel>], iteration_bounds = array<i64: 2>, scalar_prefetch = 0 : i64, scratch_operands = 0 : i64, tpu.core_type = #tpu.core_type<tc>, window_params = [{transform_indices = @transform_0, window_bounds = array<i64: 1, 8, 512>}, {pipeline_mode = #tpu.pipeline_mode<synchronous>, transform_indices = @transform_1, window_bounds = array<i64: 8, 512>}, {transform_indices = @transform_2, window_bounds = array<i64: 1, 8, 512>}]} {
    %c0 = arith.constant 0 : index
    %c0_0 = arith.constant 0 : index
    %c0_1 = arith.constant 0 : index
    %0 = vector.load %arg1[%c0, %c0_0, %c0_1] : memref<1x8x512xf32, #tpu.memory_space<vmem>>, vector<1x8x512xf32>
    %1 = vector.shape_cast %0 : vector<1x8x512xf32> to vector<8x512xf32>
    %c0_2 = arith.constant 0 : index
    %c0_3 = arith.constant 0 : index
    %2 = vector.load %arg2[%c0_2, %c0_3] : memref<8x512xf32, #tpu.memory_space<vmem>>, vector<8x512xf32>
    %3 = arith.addf %1, %2 : vector<8x512xf32>
    %c0_4 = arith.constant 0 : index
    %c0_5 = arith.constant 0 : index
    %c0_6 = arith.constant 0 : index
    %4 = vector.load %arg3[%c0_4, %c0_5, %c0_6] : memref<1x8x512xf32, #tpu.memory_space<vmem>>, vector<1x8x512xf32>
    %5 = vector.shape_cast %4 : vector<1x8x512xf32> to vector<8x512xf32>
    %6 = vector.shape_cast %3 : vector<8x512xf32> to vector<1x8x512xf32>
    tpu.vector_store %arg3[%c0_4, %c0_5, %c0_6], %6 {strides = array<i32>} : memref<1x8x512xf32, #tpu.memory_space<vmem>>, vector<1x8x512xf32>,
    return
  }
  func.func @transform_0(%arg0: i32) -> (i32, i32, i32) {
    %c0_i32 = arith.constant 0 : i32
    %c0_i32_0 = arith.constant 0 : i32
    %c0_i32_1 = arith.constant 0 : i32
    return %arg0, %c0_i32, %c0_i32_0 : i32, i32, i32
  }
  func.func @transform_1(%arg0: i32) -> (i32, i32) {
    %c0_i32 = arith.constant 0 : i32
    %c0_i32_0 = arith.constant 0 : i32
    %c0_i32_1 = arith.constant 0 : i32
    return %c0_i32, %c0_i32_0 : i32, i32
  }
  func.func @transform_2(%arg0: i32) -> (i32, i32, i32) {
    %c0_i32 = arith.constant 0 : i32
    %c0_i32_0 = arith.constant 0 : i32
    %c0_i32_1 = arith.constant 0 : i32
    return %arg0, %c0_i32, %c0_i32_0 : i32, i32, i32
  }
}

</mosaic_0001>

<llo_original>
// kernel: tpu_custom_call.1
$region0: #{tpu_custom_call.1}
  #allocation0 [shape = 'u32[]', space=smem, size = 0x4, offset = 0x4, fixed_abs, tag = 'smem constant byte address 0x4 - core index']
  #allocation1 [shape = 'u32[144,128]{1,0:T(1,128)}', space=vmem, size = 0x12000, scoped, tag = 'internal scratch']
  %s0 = inlined_call_operand.hbm [shape: f32[2,8,512], index: 0, kind: input, shape index: {}]
  %s1 = inlined_call_operand.hbm [shape: f32[8,512], index: 1, kind: input, shape index: {}]
  %s2 = inlined_call_operand.hbm [shape: f32[2,8,512], index: 2, kind: output, shape index: {}]
  %s3 = sld [smem:[#allocation0]]
  $region49: #{tpu_custom_call.1} parent=0
    _
  %s5 = ssub.s32 1, %s3
  %s6 = scalar_select 0, %s5, %s3
  $region1: #{tpu_custom_call.1} parent=0
    #allocation2 [shape = 'u8[32768]{0}', space=vmem, size = 0x8000, scoped, tag = 'input window, operand 0']
    #allocation3 [shape = 's32[2]{0}', space=sflag, size = 0x8, scoped, tag = 'scoped memory for tpu_custom_call.1']
    #allocation4 [shape = 's32[2]{0}', space=sflag, size = 0x8, scoped, tag = 'scoped memory for tpu_custom_call.1']
    #allocation5 [shape = 'u8[16384]{0}', space=vmem, size = 0x4000, scoped, tag = 'input window, operand 1, single buffered']
    #allocation6 [shape = 's32[1]{0}', space=sflag, size = 0x4, scoped, tag = 'scoped memory for tpu_custom_call.1']
    #allocation7 [shape = 'u8[32768]{0}', space=vmem, size = 0x8000, scoped, tag = 'output window, operand 0']
    %7 = vsyncpa [#allocation3], 0
    %s8 = scalar_lea.sflag [#allocation3], 1
    %9 = vsyncpa %s8, 0
    %10 = vsyncpa [#allocation6], 0
    %11 = vsyncpa [#allocation4], 0
    %s12 = scalar_lea.sflag [#allocation4], 1
    %13 = vsyncpa %s12, 0
    loop: start=0, step=1, limit=4
    $region2: #{tpu_custom_call.1} parent=1 // loop_pre_header
      _
    $region3: #{tpu_custom_call.1} parent=1 // loop_header
      %s15 = sphi 0, %s19
      %p16 = scmp.ge.s32.totalorder %s15, 4
      %s25 = sphi 0, %s27
      %s28 = sphi 0, %s25
      %s29 = sphi 0, %s28
      %s45 = sphi 0, %s29
      %s49 = sphi 0, %s49
      %s51 = sphi 0, %s49
      %s52 = sphi 0, %s51
      %s66 = sphi 0, %s52
      %s72 = sphi 0, %s74
      %s75 = sphi 0, %s72
      %s76 = sphi 0, %s75
      %s92 = sphi 0, %s76
    $region4: #{tpu_custom_call.1} parent=1 // loop_header_branch
      %18 = sbr.rel (%p16) target = $region8
    $region5: #{tpu_custom_call.1} parent=1 // loop_body
      %s20 = ssub.s32 %s15, 1
      %s21 = ssub.s32 %s15, 2
      %s22 = sadd.s32 %s15, 1
      %s23 = ssub.s32 %s15, %s22
      %p24 = scmp.eq.s32.totalorder %s23, 0
      %s26 = sadd.s32 %s25, 1
      %s27 = scalar_select %p24, %s25, %s26
      %p30 = pneg %p24
      %p31 = scmp.eq.s32.totalorder %s15, 1
      %p32 = por %p30, %p31
      %p33 = scmp.ne.s32.totalorder %s25, %s28
      %p34 = scmp.eq.s32.totalorder %s15, 0
      %p35 = por %p33, %p34
      %p36 = scmp.ne.s32.totalorder %s25, %s28
      %p37 = scmp.eq.s32.totalorder %s20, 1
      %p38 = por %p36, %p37
      %p39 = scmp.ne.s32.totalorder %s28, %s29
      %p40 = scmp.eq.s32.totalorder %s20, 0
      %p41 = por %p39, %p40
      %p42 = scmp.ne.s32.totalorder %s28, %s29
      %p43 = scmp.eq.s32.totalorder %s21, 1
      %p44 = por %p42, %p43
      %p46 = scmp.ne.s32.totalorder %s29, %s45
      %p47 = scmp.eq.s32.totalorder %s21, 0
      %p48 = por %p46, %p47
      %s50 = sadd.s32 %s49, 1
      %p53 = scmp.eq.s32.totalorder %s15, 1
      %p54 = scmp.ne.s32.totalorder %s49, %s51
      %p55 = scmp.eq.s32.totalorder %s15, 0
      %p56 = por %p54, %p55
      %p57 = scmp.ne.s32.totalorder %s49, %s51
      %p58 = scmp.eq.s32.totalorder %s20, 1
      %p59 = por %p57, %p58
      %p60 = scmp.ne.s32.totalorder %s51, %s52
      %p61 = scmp.eq.s32.totalorder %s20, 0
      %p62 = por %p60, %p61
      %p63 = scmp.ne.s32.totalorder %s51, %s52
      %p64 = scmp.eq.s32.totalorder %s21, 1
      %p65 = por %p63, %p64
      %p67 = scmp.ne.s32.totalorder %s52, %s66
      %p68 = scmp.eq.s32.totalorder %s21, 0
      %p69 = por %p67, %p68
      %s70 = ssub.s32 %s15, %s22
      %p71 = scmp.eq.s32.totalorder %s70, 0
      %s73 = sadd.s32 %s72, 1
      %s74 = scalar_select %p71, %s72, %s73
      %p77 = pneg %p71
      %p78 = scmp.eq.s32.totalorder %s15, 1
      %p79 = por %p77, %p78
      %p80 = scmp.ne.s32.totalorder %s72, %s75
      %p81 = scmp.eq.s32.totalorder %s15, 0
      %p82 = por %p80, %p81
      %p83 = scmp.ne.s32.totalorder %s72, %s75
      %p84 = scmp.eq.s32.totalorder %s20, 1
      %p85 = por %p83, %p84
      %p86 = scmp.ne.s32.totalorder %s75, %s76
      %p87 = scmp.eq.s32.totalorder %s20, 0
      %p88 = por %p86, %p87
      %p89 = scmp.ne.s32.totalorder %s75, %s76
      %p90 = scmp.eq.s32.totalorder %s21, 1
      %p91 = por %p89, %p90
      %p93 = scmp.ne.s32.totalorder %s76, %s92
      %p94 = scmp.eq.s32.totalorder %s21, 0
      %p95 = por %p93, %p94
      %p96 = scmp.le.s32.totalorder 1, %s15
      %p97 = scmp.lt.s32.totalorder %s15, 3
      %p98 = pnand %p96, %p97
      %p99 = pneg %p98
      // Predicated region
      $region9: #{tpu_custom_call.1} parent=5 // pred_check
        _
      $region10: #{tpu_custom_call.1} parent=5 // pred_check_branch
        %101 = sbr.rel (%p98) target = $region12
      $region11: #{tpu_custom_call.1} parent=5 // pred_region
        %s102 = ssub.s32 %s15, 1
        // Predicated region
        $region13: #{tpu_custom_call.1} parent=11 // pred_check
          %p103 = pneg %p62
        $region14: #{tpu_custom_call.1} parent=11 // pred_check_branch
          %105 = sbr.rel (%p103) target = $region16
        $region15: #{tpu_custom_call.1} parent=11 // pred_region
          %s107 = ssub.s32 512, 512
          %108 = vsyncadd [#allocation6], %s107
          %s110 = sshll.u32 [#allocation5], 4
          %s111 = int_to_ptr.vmem [resolvable:$true] %s110
          %113 = dma.hbm_to_vmem [thread:$0]  %s1, 512, %s111, [#allocation6]
        $region16: #{tpu_custom_call.1} parent=11 // pred_fallthru
          _
      $region12: #{tpu_custom_call.1} parent=5 // pred_fallthru
        _
      %p114 = scmp.lt.s32.totalorder %s15, 2
      // Predicated region
      $region17: #{tpu_custom_call.1} parent=5 // pred_check
        %p115 = pneg %p114
      $region18: #{tpu_custom_call.1} parent=5 // pred_check_branch
        %117 = sbr.rel (%p115) target = $region20
      $region19: #{tpu_custom_call.1} parent=5 // pred_region
        // Predicated region
        $region21: #{tpu_custom_call.1} parent=19 // pred_check
          %p118 = pneg %p35
        $region22: #{tpu_custom_call.1} parent=19 // pred_check_branch
          %120 = sbr.rel (%p118) target = $region24
        $region23: #{tpu_custom_call.1} parent=19 // pred_region
          %s121 = sand.u32 %s25, 1
          %s122 = scalar_lea.sflag [#allocation3], %s121
          %s123 = sand.u32 %s25, 1
          %s124 = smul.addr %s123, 32
          %s125 = scalar_lea.vmem [#allocation2], %s124
          %s127 = ssub.s32 512, 512
          %128 = vsyncadd %s122, %s127
          %s129 = smul.addr %s15, 4
          %s130 = smul.addr %s129, 128
          %s131 = scalar_lea.hbm %s0, %s130
          %s133 = sshll.u32 %s125, 4
          %s134 = int_to_ptr.vmem [resolvable:$true] %s133
          %136 = dma.hbm_to_vmem [thread:$0]  %s131, 512, %s134, %s122
        $region24: #{tpu_custom_call.1} parent=19 // pred_fallthru
          _
      $region20: #{tpu_custom_call.1} parent=5 // pred_fallthru
        _
      %p137 = scmp.le.s32.totalorder 1, %s15
      %p138 = scmp.lt.s32.totalorder %s15, 3
      %p139 = pnand %p137, %p138
      %p140 = pneg %p139
      // Predicated region
      $region25: #{tpu_custom_call.1} parent=5 // pred_check
        _
      $region26: #{tpu_custom_call.1} parent=5 // pred_check_branch
        %142 = sbr.rel (%p139) target = $region28
      $region27: #{tpu_custom_call.1} parent=5 // pred_region
        %s143 = ssub.s32 %s15, 1
        %s144 = sand.u32 %s28, 1
        %s145 = scalar_lea.sflag [#allocation3], %s144
        %s146 = sand.u32 %s28, 1
        %s147 = smul.addr %s146, 32
        %s148 = scalar_lea.vmem [#allocation2], %s147
        // Predicated region
        $region29: #{tpu_custom_call.1} parent=27 // pred_check
          %p149 = pneg %p41
        $region30: #{tpu_custom_call.1} parent=27 // pred_check_branch
          %151 = sbr.rel (%p149) target = $region32
        $region31: #{tpu_custom_call.1} parent=27 // pred_region
          %152 = dma.done %s145, 512
        $region32: #{tpu_custom_call.1} parent=27 // pred_fallthru
          _
        // Predicated region
        $region33: #{tpu_custom_call.1} parent=27 // pred_check
          %p153 = pneg %p62
        $region34: #{tpu_custom_call.1} parent=27 // pred_check_branch
          %155 = sbr.rel (%p153) target = $region36
        $region35: #{tpu_custom_call.1} parent=27 // pred_region
          %156 = dma.done [#allocation6], 512
        $region36: #{tpu_custom_call.1} parent=27 // pred_fallthru
          _
        %s157 = sand.u32 %s28, 1
        %s158 = scalar_lea.sflag [#allocation3], %s157
        %s159 = sand.u32 %s28, 1
        %s160 = smul.addr %s159, 32
        %s161 = scalar_lea.vmem [#allocation2], %s160
        %p162 = pneg %p41
        %p163 = pneg %p38
        %p164 = pneg %p62
        %p165 = pneg %p59
        %p166 = pneg %p88
        %p167 = pneg %p85
        %s168 = sand.u32 %s75, 1
        %s169 = scalar_lea.sflag [#allocation4], %s168
        %s170 = sand.u32 %s75, 1
        %s171 = smul.addr %s170, 32
        %s172 = scalar_lea.vmem [#allocation7], %s171
        %v173 = vld [vmem:[%s148] sm:$0xff]
        %v174 = vld [vmem:[%s148 + $0x8] sm:$0xff]
        %v175 = vld [vmem:[%s148 + $0x10] sm:$0xff]
        %v176 = vld [vmem:[%s148 + $0x18] sm:$0xff]
        %v177 = vld [vmem:[#allocation5] sm:$0xff]
        %v178 = vld [vmem:[#allocation5 + $0x8] sm:$0xff]
        %v179 = vld [vmem:[#allocation5 + $0x10] sm:$0xff]
        %v180 = vld [vmem:[#allocation5 + $0x18] sm:$0xff]
        %v181 = vadd.f32 %v173, %v177
        %v182 = vadd.f32 %v174, %v178
        %v183 = vadd.f32 %v175, %v179
        %v184 = vadd.f32 %v176, %v180
        %185 = vst [vmem:[%s172] sm:$0xff] %v181
        %186 = vst [vmem:[%s172 + $0x8] sm:$0xff] %v182
        %187 = vst [vmem:[%s172 + $0x10] sm:$0xff] %v183
        %188 = vst [vmem:[%s172 + $0x18] sm:$0xff] %v184
        %s189 = sand.u32 %s75, 1
        %s190 = scalar_lea.sflag [#allocation4], %s189
        %s191 = sand.u32 %s75, 1
        %s192 = smul.addr %s191, 32
        %s193 = scalar_lea.vmem [#allocation7], %s192
        // Predicated region
        $region37: #{tpu_custom_call.1} parent=27 // pred_check
          %p194 = pneg %p85
        $region38: #{tpu_custom_call.1} parent=27 // pred_check_branch
          %196 = sbr.rel (%p194) target = $region40
        $region39: #{tpu_custom_call.1} parent=27 // pred_region
          %s198 = ssub.s32 512, 512
          %199 = vsyncadd %s190, %s198
          %s200 = smul.addr %s20, 4
          %s201 = smul.addr %s200, 128
          %s202 = scalar_lea.hbm %s2, %s201
          %s204 = sshll.u32 %s193, 4
          %s205 = int_to_ptr.vmem [resolvable:$true] %s204
          %207 = dma.vmem_to_hbm [thread:$0]  %s205, 512, %s202, %s190
        $region40: #{tpu_custom_call.1} parent=27 // pred_fallthru
          _
      $region28: #{tpu_custom_call.1} parent=5 // pred_fallthru
        _
      %p208 = scmp.le.s32.totalorder 2, %s15
      // Predicated region
      $region41: #{tpu_custom_call.1} parent=5 // pred_check
        %p209 = pneg %p208
      $region42: #{tpu_custom_call.1} parent=5 // pred_check_branch
        %211 = sbr.rel (%p209) target = $region44
      $region43: #{tpu_custom_call.1} parent=5 // pred_region
        %s212 = ssub.s32 %s15, 2
        // Predicated region
        $region45: #{tpu_custom_call.1} parent=43 // pred_check
          %p213 = pneg %p91
        $region46: #{tpu_custom_call.1} parent=43 // pred_check_branch
          %215 = sbr.rel (%p213) target = $region48
        $region47: #{tpu_custom_call.1} parent=43 // pred_region
          %s216 = sand.u32 %s76, 1
          %s217 = scalar_lea.sflag [#allocation4], %s216
          %s218 = sand.u32 %s76, 1
          %s219 = smul.addr %s218, 32
          %s220 = scalar_lea.vmem [#allocation7], %s219
          %221 = dma.done %s217, 512
        $region48: #{tpu_custom_call.1} parent=43 // pred_fallthru
          _
      $region44: #{tpu_custom_call.1} parent=5 // pred_fallthru
        _
    $region6: #{tpu_custom_call.1} parent=1 // loop_footer
      %s19 = sadd.s32 1, %s15
    $region7: #{tpu_custom_call.1} parent=1 // loop_footer_branch
      %14 = sbr.rel target = $region3
    $region8: #{tpu_custom_call.1} parent=1 // loop_exit
      _
    %222 = vsyncpa [#allocation3], 1
    %s223 = scalar_lea.sflag [#allocation3], 1
    %224 = vsyncpa %s223, 1
    %225 = vsyncpa [#allocation6], 1
    %226 = vsyncpa [#allocation4], 1
    %s227 = scalar_lea.sflag [#allocation4], 1
    %228 = vsyncpa %s227, 1

</llo_original>
